<compile_context>
chip_gen: v5e
topology: v5e:2x2
jax: 0.10.0
libtpu: 0.0.40
codegen_flags: <defaults>
</compile_context>

<pallas_src>
import functools

import jax
import jax.numpy as jnp
from jax.experimental import pallas as pl
from jax.experimental.pallas import tpu as pltpu


# ----------------------------------------------------------------------------
# Fused kernel: N residual-linear layers + LayerNorm epilogue.
# ----------------------------------------------------------------------------
def _make_history_kernel(n_layers, tied, d_valid, d_pad, eps=1e-5):
    needs_mask = d_pad != d_valid

    def kernel(x_ref, w_ref, b_ref, g_ref, bt_ref, o_ref):
        # f32 carry for the residual stream across all layers; cast to the
        # output dtype exactly once after LayerNorm.
        x = x_ref[...].astype(jnp.float32)
        mm_dtype = w_ref.dtype          # feed MXU operands in the weight dtype
                                        # (bf16 weights -> bf16 MXU, f32 acc)

        def load_layer(idx):
            w = w_ref[idx]                               # (Dp, Dp)
            b = b_ref[idx].astype(jnp.float32)           # (1, Dp)
            return w, b

        if tied:
            w_t, b_t = load_layer(0)                     # single resident copy
        for n in range(n_layers):                        # static unrolled loop
            w, b = (w_t, b_t) if tied else load_layer(n)
            h = jnp.dot(x.astype(mm_dtype), w,
                        preferred_element_type=jnp.float32) + b
            x = x + jnp.maximum(h, 0.0)

        # LayerNorm over the valid hidden columns.  Padded columns of the
        # carry are exactly zero by construction (zero-padded x, weights,
        # biases), so sums over the padded width equal sums over D.
        inv_d = jnp.float32(1.0 / d_valid)
        mean = jnp.sum(x, axis=-1, keepdims=True) * inv_d
        cent = x - mean
        if needs_mask:
            col = jax.lax.broadcasted_iota(jnp.int32, cent.shape, 1)
            cent = jnp.where(col < d_valid, cent, 0.0)
        var = jnp.sum(cent * cent, axis=-1, keepdims=True) * inv_d
        xhat = cent * jax.lax.rsqrt(var + eps)
        y = xhat * g_ref[...].astype(jnp.float32) + bt_ref[...].astype(jnp.float32)
        o_ref[...] = y.astype(o_ref.dtype)

    return kernel


def _round_up(x, m):
    return pl.cdiv(x, m) * m


# ----------------------------------------------------------------------------
# Wrapper: padding, tiling, pallas_call.
# ----------------------------------------------------------------------------
@functools.partial(jax.jit, static_argnames=("n_layers", "tied"))
def history_encoder_forward(x, w_stack, b_stack, gamma, beta, *,
                            n_layers, tied):
    B, S, D = x.shape
    L = w_stack.shape[0]                     # 1 if tied else n_layers
    M = B * S

    # Lane-dense hidden dim (multiple of 128); row tile multiple of 8.
    Dp = max(128, _round_up(D, 128))
    TM = min(512, _round_up(M, 8))
    Mp = _round_up(M, TM)

    x2d = x.reshape(M, D)
    x_p = jnp.pad(x2d, ((0, Mp - M), (0, Dp - D)))
    w_p = jnp.pad(w_stack, ((0, 0), (0, Dp - D), (0, Dp - D)))
    b_p = jnp.pad(b_stack, ((0, 0), (0, 0), (0, Dp - D)))
    g_p = jnp.pad(gamma, ((0, 0), (0, Dp - D)))
    bt_p = jnp.pad(beta, ((0, 0), (0, Dp - D)))

    kernel = _make_history_kernel(n_layers, tied, D, Dp)

    # VMEM budget: double-buffered in/out row tiles + resident weights.
    # TODO(synk): stream weights per layer (manual DMA) when L*Dp*Dp is too
    # large to stay resident under v7x's 64 MiB VMEM.
    xb = jnp.dtype(x.dtype).itemsize
    wb = jnp.dtype(w_stack.dtype).itemsize
    est = (2 * 2 * TM * Dp * xb                  # in + out, double-buffered
           + 2 * L * Dp * Dp * wb                # stacked weights
           + 2 * L * Dp * wb + 4 * Dp * 4        # biases, gamma/beta
           + 4 * TM * Dp * 4)                    # f32 carry / temporaries
    vmem_limit = int(min(max(2 * est, 32 * 1024 * 1024), 48 * 1024 * 1024))

    grid = (Mp // TM,)
    y_p = pl.pallas_call(
        kernel,
        out_shape=jax.ShapeDtypeStruct((Mp, Dp), x.dtype),
        grid=grid,
        in_specs=[
            pl.BlockSpec((TM, Dp), lambda i: (i, 0)),        # activations
            pl.BlockSpec((L, Dp, Dp), lambda i: (0, 0, 0)),  # weights (resident)
            pl.BlockSpec((L, 1, Dp), lambda i: (0, 0, 0)),   # biases
            pl.BlockSpec((1, Dp), lambda i: (0, 0)),         # LN gamma
            pl.BlockSpec((1, Dp), lambda i: (0, 0)),         # LN beta
        ],
        out_specs=pl.BlockSpec((TM, Dp), lambda i: (i, 0)),
        compiler_params=pltpu.CompilerParams(
            dimension_semantics=("parallel",),
            vmem_limit_bytes=vmem_limit),
    )(x_p, w_p, b_p, g_p, bt_p)

    return y_p[:M, :D].reshape(B, S, D)


# ----------------------------------------------------------------------------
# HistoryEncoder forward (stack of N layers, sum of per-layer losses, LN).
# ----------------------------------------------------------------------------
class HistoryEncoderPallas:
    def __init__(self, layer_size, N, tie_layers=False, key=None,
                 param_dtype=jnp.float32):
        self.layer_size = layer_size
        self.N = N
        self.tie_layers = bool(tie_layers)
        key = jax.random.PRNGKey(0) if key is None else key
        kw, kb = jax.random.split(key)
        L = 1 if tie_layers else N
        ws, bs = [], []
        for n in range(L):
            kw_n, kb_n = jax.random.split(jax.random.fold_in(kw, n))
            ws.append(jax.random.normal(kw_n, (layer_size, layer_size),
                                        jnp.float32) * 0.02)
            bs.append(jax.random.normal(kb_n, (1, layer_size),
                                        jnp.float32) * 0.02)
        self.w_stack = jnp.stack(ws).astype(param_dtype)      # (L, D, D)
        self.b_stack = jnp.stack(bs).astype(param_dtype)      # (L, 1, D)
        # nn.LayerNorm(layer_size): weight=1, bias=0 at init.
        self.ln_gamma = jnp.ones((1, layer_size), jnp.float32)
        self.ln_beta = jnp.zeros((1, layer_size), jnp.float32)

    def __call__(self, x, relation, mask, sep_id, history_reg):
        # relation / mask / sep_id / history_reg are consumed by the injected
        # layer in the original module; the stand-in layer does not use them.
        y = history_encoder_forward(
            x, self.w_stack, self.b_stack, self.ln_gamma, self.ln_beta,
            n_layers=self.N, tied=self.tie_layers)
        # loss = torch.tensor(0.0); loss += _loss per layer (stand-in: 0.0).
        loss = jnp.float32(0.0)
        for _ in range(self.N):
            loss = loss + jnp.float32(0.0)
        return y, loss


# ----------------------------------------------------------------------------
# Demo
# ----------------------------------------------------------------------------
if __name__ == "__main__":
    key = jax.random.PRNGKey(0)
    kx, kr = jax.random.split(key)

    B, S, D, N = 2, 8, 32, 2
    x = jax.random.normal(kx, (B, S, D), jnp.float32)
    relation = jax.random.randint(kr, (B, S, S), 0, 5, jnp.int32)
    mask = jnp.ones((B, 1, S), jnp.float32)
    sep_id = jnp.array([0, S - 1], jnp.int32)
    history_reg = 0.1

    enc = HistoryEncoderPallas(layer_size=D, N=N, tie_layers=False,
                               key=jax.random.PRNGKey(0))
    out, loss = enc(x, relation, mask, sep_id, history_reg)
    out = jax.block_until_ready(out)
    loss = jax.block_until_ready(loss)

    assert out.shape == (B, S, D)
    assert loss.shape == ()
    print("KERNEL_OK")
</pallas_src>

<mosaic_0001>
module attributes {stable_mosaic.version = 11 : i64} {
  func.func @kernel(%arg0: i32, %arg1: memref<16x128xf32, #tpu.memory_space<vmem>>, %arg2: memref<2x128x128xf32, #tpu.memory_space<vmem>>, %arg3: memref<2x1x128xf32, #tpu.memory_space<vmem>>, %arg4: memref<1x128xf32, #tpu.memory_space<vmem>>, %arg5: memref<1x128xf32, #tpu.memory_space<vmem>>, %arg6: memref<16x128xf32, #tpu.memory_space<vmem>>) attributes {dimension_semantics = [#tpu.dimension_semantics<parallel>], iteration_bounds = array<i64: 1>, scalar_prefetch = 0 : i64, scratch_operands = 0 : i64, tpu.core_type = #tpu.core_type<tc>, window_params = [{transform_indices = @transform_0, window_bounds = array<i64: 16, 128>}, {pipeline_mode = #tpu.pipeline_mode<synchronous>, transform_indices = @transform_1, window_bounds = array<i64: 2, 128, 128>}, {pipeline_mode = #tpu.pipeline_mode<synchronous>, transform_indices = @transform_2, window_bounds = array<i64: 2, 1, 128>}, {pipeline_mode = #tpu.pipeline_mode<synchronous>, transform_indices = @transform_3, window_bounds = array<i64: 1, 128>}, {pipeline_mode = #tpu.pipeline_mode<synchronous>, transform_indices = @transform_4, window_bounds = array<i64: 1, 128>}, {transform_indices = @transform_5, window_bounds = array<i64: 16, 128>}]} {
    %c0 = arith.constant 0 : index
    %c0_0 = arith.constant 0 : index
    %0 = vector.load %arg1[%c0, %c0_0] : memref<16x128xf32, #tpu.memory_space<vmem>>, vector<16x128xf32>
    %c0_1 = arith.constant 0 : index
    %c0_2 = arith.constant 0 : index
    %c0_3 = arith.constant 0 : index
    %1 = vector.load %arg2[%c0_1, %c0_2, %c0_3] : memref<2x128x128xf32, #tpu.memory_space<vmem>>, vector<1x128x128xf32>
    %2 = vector.shape_cast %1 : vector<1x128x128xf32> to vector<128x128xf32>
    %c0_4 = arith.constant 0 : index
    %c0_5 = arith.constant 0 : index
    %c0_6 = arith.constant 0 : index
    %3 = vector.load %arg3[%c0_4, %c0_5, %c0_6] : memref<2x1x128xf32, #tpu.memory_space<vmem>>, vector<1x1x128xf32>
    %4 = vector.shape_cast %3 : vector<1x1x128xf32> to vector<1x128xf32>
    %cst = arith.constant dense<0.000000e+00> : vector<16x128xf32>
    %5 = tpu.matmul %0, %2, %cst {dimension_numbers = #tpu.dot_dimension_numbers<[1], [0], [0], [1], [0, 0, 1, 1], [], []>} : vector<16x128xf32>, vector<128x128xf32>, vector<16x128xf32> -> vector<16x128xf32>
    %6 = vector.broadcast %4 : vector<1x128xf32> to vector<16x128xf32>
    %7 = arith.addf %5, %6 : vector<16x128xf32>
    %cst_7 = arith.constant 0.000000e+00 : f32
    %8 = vector.broadcast %cst_7 : f32 to vector<16x128xf32>
    %9 = arith.maximumf %7, %8 : vector<16x128xf32>
    %10 = arith.addf %0, %9 : vector<16x128xf32>
    %c1 = arith.constant 1 : index
    %c0_8 = arith.constant 0 : index
    %c0_9 = arith.constant 0 : index
    %11 = vector.load %arg2[%c1, %c0_8, %c0_9] : memref<2x128x128xf32, #tpu.memory_space<vmem>>, vector<1x128x128xf32>
    %12 = vector.shape_cast %11 : vector<1x128x128xf32> to vector<128x128xf32>
    %c1_10 = arith.constant 1 : index
    %c0_11 = arith.constant 0 : index
    %c0_12 = arith.constant 0 : index
    %13 = vector.load %arg3[%c1_10, %c0_11, %c0_12] : memref<2x1x128xf32, #tpu.memory_space<vmem>>, vector<1x1x128xf32>
    %14 = vector.shape_cast %13 : vector<1x1x128xf32> to vector<1x128xf32>
    %cst_13 = arith.constant dense<0.000000e+00> : vector<16x128xf32>
    %15 = tpu.matmul %10, %12, %cst_13 {dimension_numbers = #tpu.dot_dimension_numbers<[1], [0], [0], [1], [0, 0, 1, 1], [], []>} : vector<16x128xf32>, vector<128x128xf32>, vector<16x128xf32> -> vector<16x128xf32>
    %16 = vector.broadcast %14 : vector<1x128xf32> to vector<16x128xf32>
    %17 = arith.addf %15, %16 : vector<16x128xf32>
    %cst_14 = arith.constant 0.000000e+00 : f32
    %18 = vector.broadcast %cst_14 : f32 to vector<16x128xf32>
    %19 = arith.maximumf %17, %18 : vector<16x128xf32>
    %20 = arith.addf %10, %19 : vector<16x128xf32>
    %cst_15 = arith.constant dense<0.000000e+00> : vector<16xf32>
    %21 = vector.multi_reduction <add>, %20, %cst_15 [1] : vector<16x128xf32> to vector<16xf32>
    %22 = vector.shape_cast %21 : vector<16xf32> to vector<16x1xf32>
    %cst_16 = arith.constant 3.125000e-02 : f32
    %23 = vector.broadcast %cst_16 : f32 to vector<16x1xf32>
    %24 = arith.mulf %22, %23 : vector<16x1xf32>
    %25 = vector.broadcast %24 : vector<16x1xf32> to vector<16x128xf32>
    %26 = arith.subf %20, %25 : vector<16x128xf32>
    %27 = tpu.iota {dimensions = array<i32: 1>} : vector<16x128xi32>
    %c32_i32 = arith.constant 32 : i32
    %28 = vector.broadcast %c32_i32 : i32 to vector<16x128xi32>
    %29 = arith.cmpi slt, %27, %28 : vector<16x128xi32>
    %cst_17 = arith.constant 0.000000e+00 : f32
    %30 = vector.broadcast %cst_17 : f32 to vector<16x128xf32>
    %31 = arith.select %29, %26, %30 : vector<16x128xi1>, vector<16x128xf32>
    %32 = arith.mulf %31, %31 : vector<16x128xf32>
    %cst_18 = arith.constant dense<0.000000e+00> : vector<16xf32>
    %33 = vector.multi_reduction <add>, %32, %cst_18 [1] : vector<16x128xf32> to vector<16xf32>
    %34 = vector.shape_cast %33 : vector<16xf32> to vector<16x1xf32>
    %cst_19 = arith.constant 3.125000e-02 : f32
    %35 = vector.broadcast %cst_19 : f32 to vector<16x1xf32>
    %36 = arith.mulf %34, %35 : vector<16x1xf32>
    %cst_20 = arith.constant 9.99999974E-6 : f32
    %37 = vector.broadcast %cst_20 : f32 to vector<16x1xf32>
    %38 = arith.addf %36, %37 : vector<16x1xf32>
    %39 = math.rsqrt %38 : vector<16x1xf32>
    %40 = vector.broadcast %39 : vector<16x1xf32> to vector<16x128xf32>
    %41 = arith.mulf %31, %40 : vector<16x128xf32>
    %c0_21 = arith.constant 0 : index
    %c0_22 = arith.constant 0 : index
    %42 = vector.load %arg4[%c0_21, %c0_22] : memref<1x128xf32, #tpu.memory_space<vmem>>, vector<1x128xf32>
    %43 = vector.broadcast %42 : vector<1x128xf32> to vector<16x128xf32>
    %44 = arith.mulf %41, %43 : vector<16x128xf32>
    %c0_23 = arith.constant 0 : index
    %c0_24 = arith.constant 0 : index
    %45 = vector.load %arg5[%c0_23, %c0_24] : memref<1x128xf32, #tpu.memory_space<vmem>>, vector<1x128xf32>
    %46 = vector.broadcast %45 : vector<1x128xf32> to vector<16x128xf32>
    %47 = arith.addf %44, %46 : vector<16x128xf32>
    %c0_25 = arith.constant 0 : index
    %c0_26 = arith.constant 0 : index
    %48 = vector.load %arg6[%c0_25, %c0_26] : memref<16x128xf32, #tpu.memory_space<vmem>>, vector<16x128xf32>
    tpu.vector_store %arg6[%c0_25, %c0_26], %47 {strides = array<i32>} : memref<16x128xf32, #tpu.memory_space<vmem>>, vector<16x128xf32>,
    return
  }
  func.func @transform_0(%arg0: i32) -> (i32, i32) {
    %c0_i32 = arith.constant 0 : i32
    %c0_i32_0 = arith.constant 0 : i32
    return %arg0, %c0_i32 : i32, i32
  }
  func.func @transform_1(%arg0: i32) -> (i32, i32, i32) {
    %c0_i32 = arith.constant 0 : i32
    %c0_i32_0 = arith.constant 0 : i32
    %c0_i32_1 = arith.constant 0 : i32
    %c0_i32_2 = arith.constant 0 : i32
    return %c0_i32, %c0_i32_0, %c0_i32_1 : i32, i32, i32
  }
  func.func @transform_2(%arg0: i32) -> (i32, i32, i32) {
    %c0_i32 = arith.constant 0 : i32
    %c0_i32_0 = arith.constant 0 : i32
    %c0_i32_1 = arith.constant 0 : i32
    %c0_i32_2 = arith.constant 0 : i32
    return %c0_i32, %c0_i32_0, %c0_i32_1 : i32, i32, i32
  }
  func.func @transform_3(%arg0: i32) -> (i32, i32) {
    %c0_i32 = arith.constant 0 : i32
    %c0_i32_0 = arith.constant 0 : i32
    %c0_i32_1 = arith.constant 0 : i32
    return %c0_i32, %c0_i32_0 : i32, i32
  }
  func.func @transform_4(%arg0: i32) -> (i32, i32) {
    %c0_i32 = arith.constant 0 : i32
    %c0_i32_0 = arith.constant 0 : i32
    %c0_i32_1 = arith.constant 0 : i32
    return %c0_i32, %c0_i32_0 : i32, i32
  }
  func.func @transform_5(%arg0: i32) -> (i32, i32) {
    %c0_i32 = arith.constant 0 : i32
    %c0_i32_0 = arith.constant 0 : i32
    return %arg0, %c0_i32 : i32, i32
  }
}

</mosaic_0001>

<llo_original>
// kernel: history_encoder_forward.1
$region0: #{history_encoder_forward.1}
  #allocation0 [shape = 'u32[]', space=smem, size = 0x4, offset = 0x4, fixed_abs, tag = 'smem constant byte address 0x4 - core index']
  #allocation1 [shape = 'u32[72,128]{1,0:T(1,128)}', space=vmem, size = 0x9000, scoped, tag = 'internal scratch']
  %s0 = inlined_call_operand.vmem [shape: f32[16,128], index: 0, kind: input, shape index: {}]
  %s1 = inlined_call_operand.vmem [shape: f32[2,128,128], index: 1, kind: input, shape index: {}]
  %s2 = inlined_call_operand.vmem [shape: f32[2,1,128], index: 2, kind: input, shape index: {}]
  %s3 = inlined_call_operand.vmem [shape: f32[1,128], index: 3, kind: input, shape index: {}]
  %s4 = inlined_call_operand.vmem [shape: f32[1,128], index: 4, kind: input, shape index: {}]
  %s5 = inlined_call_operand.vmem [shape: f32[16,128], index: 5, kind: output, shape index: {}]
  %s6 = sld [smem:[#allocation0]]
  $region30: #{history_encoder_forward.1} parent=0
    _
  %s8 = ssub.s32 1, %s6
  %s9 = scalar_select 0, %s8, %s6
  // Predicated region
  $region2: #{history_encoder_forward.1} parent=0 // pred_check
    _
  $region3: #{history_encoder_forward.1} parent=0 // pred_check_branch
    %11 = sbr.rel (0) target = $region5
  $region4: #{history_encoder_forward.1} parent=0 // pred_region
    _
  $region5: #{history_encoder_forward.1} parent=0 // pred_fallthru
    _
  // Predicated region
  $region6: #{history_encoder_forward.1} parent=0 // pred_check
    _
  $region7: #{history_encoder_forward.1} parent=0 // pred_check_branch
    %13 = sbr.rel (0) target = $region9
  $region8: #{history_encoder_forward.1} parent=0 // pred_region
    _
  $region9: #{history_encoder_forward.1} parent=0 // pred_fallthru
    _
  // Predicated region
  $region10: #{history_encoder_forward.1} parent=0 // pred_check
    _
  $region11: #{history_encoder_forward.1} parent=0 // pred_check_branch
    %15 = sbr.rel (0) target = $region13
  $region12: #{history_encoder_forward.1} parent=0 // pred_region
    _
  $region13: #{history_encoder_forward.1} parent=0 // pred_fallthru
    _
  // Predicated region
  $region14: #{history_encoder_forward.1} parent=0 // pred_check
    _
  $region15: #{history_encoder_forward.1} parent=0 // pred_check_branch
    %17 = sbr.rel (0) target = $region17
  $region16: #{history_encoder_forward.1} parent=0 // pred_region
    _
  $region17: #{history_encoder_forward.1} parent=0 // pred_fallthru
    _
  // Predicated region
  $region18: #{history_encoder_forward.1} parent=0 // pred_check
    _
  $region19: #{history_encoder_forward.1} parent=0 // pred_check_branch
    %19 = sbr.rel (0) target = $region21
  $region20: #{history_encoder_forward.1} parent=0 // pred_region
    _
  $region21: #{history_encoder_forward.1} parent=0 // pred_fallthru
    _
  %v20 = vld [vmem:[%s0] sm:$0xff]
  %v21 = vld [vmem:[%s0 + $0x8] sm:$0xff]
  %v22 = vld [vmem:[%s1] sm:$0xff]
  %v23 = vld [vmem:[%s1 + $0x8] sm:$0xff]
  %v24 = vld [vmem:[%s1 + $0x10] sm:$0xff]
  %v25 = vld [vmem:[%s1 + $0x18] sm:$0xff]
  %v26 = vld [vmem:[%s1 + $0x20] sm:$0xff]
  %v27 = vld [vmem:[%s1 + $0x28] sm:$0xff]
  %v28 = vld [vmem:[%s1 + $0x30] sm:$0xff]
  %v29 = vld [vmem:[%s1 + $0x38] sm:$0xff]
  %v30 = vld [vmem:[%s1 + $0x40] sm:$0xff]
  %v31 = vld [vmem:[%s1 + $0x48] sm:$0xff]
  %v32 = vld [vmem:[%s1 + $0x50] sm:$0xff]
  %v33 = vld [vmem:[%s1 + $0x58] sm:$0xff]
  %v34 = vld [vmem:[%s1 + $0x60] sm:$0xff]
  %v35 = vld [vmem:[%s1 + $0x68] sm:$0xff]
  %v36 = vld [vmem:[%s1 + $0x70] sm:$0xff]
  %v37 = vld [vmem:[%s1 + $0x78] sm:$0xff]
  %v38 = vld [vmem:[%s2] sm:$0x1]
  %v40 = vperm.slane %v38, 0
  %42 = vmatpush.msra.mxu0 %v37
  %43 = vmatpush.msra.mxu0 %v36
  %44 = vmatpush.msra.mxu0 %v35
  %45 = vmatpush.msra.mxu0 %v34
  %46 = vmatpush.msra.mxu0 %v33
  %47 = vmatpush.msra.mxu0 %v32
  %48 = vmatpush.msra.mxu0 %v31
  %49 = vmatpush.msra.mxu0 %v30
  %50 = vmatpush.msra.mxu0 %v29
  %51 = vmatpush.msra.mxu0 %v28
  %52 = vmatpush.msra.mxu0 %v27
  %53 = vmatpush.msra.mxu0 %v26
  %54 = vmatpush.msra.mxu0 %v25
  %55 = vmatpush.msra.mxu0 %v24
  %56 = vmatpush.msra.mxu0 %v23
  %57 = vmatpush.msra.mxu0 %v22
  %58 = vmatmul.f32.gmra.mxu0 %v20
  %v59 = vpop.f32.mrf.mxu0
  %v60 = vadd.f32 %v40, %v59
  %61 = vmatmul.f32.gmra.mxu0 %v21
  %v62 = vpop.f32.mrf.mxu0
  %v63 = vadd.f32 %v40, %v62
  %64 = vdwg.mxu0
  %v65 = vmax.f32 %v60, 0.0
  %v66 = vmax.f32 %v63, 0.0
  %v67 = vadd.f32 %v20, %v65
  %v68 = vadd.f32 %v21, %v66
  %s69 = scalar_lea.vmem %s1, 128
  %v70 = vld [vmem:[%s69] sm:$0xff]
  %v71 = vld [vmem:[%s69 + $0x8] sm:$0xff]
  %v72 = vld [vmem:[%s69 + $0x10] sm:$0xff]
  %v73 = vld [vmem:[%s69 + $0x18] sm:$0xff]
  %v74 = vld [vmem:[%s69 + $0x20] sm:$0xff]
  %v75 = vld [vmem:[%s69 + $0x28] sm:$0xff]
  %v76 = vld [vmem:[%s69 + $0x30] sm:$0xff]
  %v77 = vld [vmem:[%s69 + $0x38] sm:$0xff]
  %v78 = vld [vmem:[%s69 + $0x40] sm:$0xff]
  %v79 = vld [vmem:[%s69 + $0x48] sm:$0xff]
  %v80 = vld [vmem:[%s69 + $0x50] sm:$0xff]
  %v81 = vld [vmem:[%s69 + $0x58] sm:$0xff]
  %v82 = vld [vmem:[%s69 + $0x60] sm:$0xff]
  %v83 = vld [vmem:[%s69 + $0x68] sm:$0xff]
  %v84 = vld [vmem:[%s69 + $0x70] sm:$0xff]
  %v85 = vld [vmem:[%s69 + $0x78] sm:$0xff]
  %s86 = scalar_lea.vmem %s2, 1
  %v87 = vld [vmem:[%s86] sm:$0x1]
  %v89 = vperm.slane %v87, 0
  %91 = vmatpush.msra.mxu0 %v85
  %92 = vmatpush.msra.mxu0 %v84
  %93 = vmatpush.msra.mxu0 %v83
  %94 = vmatpush.msra.mxu0 %v82
  %95 = vmatpush.msra.mxu0 %v81
  %96 = vmatpush.msra.mxu0 %v80
  %97 = vmatpush.msra.mxu0 %v79
  %98 = vmatpush.msra.mxu0 %v78
  %99 = vmatpush.msra.mxu0 %v77
  %100 = vmatpush.msra.mxu0 %v76
  %101 = vmatpush.msra.mxu0 %v75
  %102 = vmatpush.msra.mxu0 %v74
  %103 = vmatpush.msra.mxu0 %v73
  %104 = vmatpush.msra.mxu0 %v72
  %105 = vmatpush.msra.mxu0 %v71
  %106 = vmatpush.msra.mxu0 %v70
  %107 = vmatmul.f32.gmra.mxu0 %v67
  %v108 = vpop.f32.mrf.mxu0
  %v109 = vadd.f32 %v89, %v108
  %110 = vmatmul.f32.gmra.mxu0 %v68
  %v111 = vpop.f32.mrf.mxu0
  %v112 = vadd.f32 %v89, %v111
  %113 = vdwg.mxu0
  %v114 = vmax.f32 %v109, 0.0
  %v115 = vmax.f32 %v112, 0.0
  %v116 = vadd.f32 %v67, %v114
  %v117 = vadd.f32 %v68, %v115
  %118 = vadd.xlane.f32.xlu0 %v116
  %v119 = vpop.xlane.xlu0 %118
  %120 = vadd.xlane.f32.xlu0 %v117
  %v121 = vpop.xlane.xlu0 %120
  %v122 = vmul.f32 %v119, 0.03125
  %v123 = vmul.f32 %v121, 0.03125
  %v124 = vsub.f32 %v116, %v122
  %v125 = vsub.f32 %v117, %v123
  %v126 = vlaneseq
  %v127 = vand.u32 %v126, 127
  %vm128 = vcmp.lt.s32.totalorder %v127, 32
  %v129 = vsel %vm128, %v124, 0.0
  %v130 = vsel %vm128, %v125, 0.0
  %v131 = vmul.f32 %v129, %v129
  %v132 = vmul.f32 %v130, %v130
  %133 = vadd.xlane.f32.xlu0 %v131
  %v134 = vpop.xlane.xlu0 %133
  %135 = vadd.xlane.f32.xlu0 %v132
  %v136 = vpop.xlane.xlu0 %135
  %v137 = vmul.f32 %v134, 0.03125
  %v138 = vmul.f32 %v136, 0.03125
  %v139 = vadd.f32 %v137, 1e-05
  %v140 = vadd.f32 %v138, 1e-05
  %v141 = vrsqrt.pop %v139
  %v142 = vmul.f32 %v141, %v139
  %v143 = vmul.f32 %v142, %v141
  %v144 = vmul.f32 0.5, %v143
  %v145 = vsub.f32 1.5, %v144
  %v146 = vmul.f32 %v141, %v145
  %vm147 = vweird.f32 %v139
  %vm148 = vweird.f32 %v141
  %vm149 = vmor %vm147, %vm148
  %v150 = vsel %vm149, %v141, %v146
  %v151 = vrsqrt.pop %v140
  %v152 = vmul.f32 %v151, %v140
  %v153 = vmul.f32 %v152, %v151
  %v154 = vmul.f32 0.5, %v153
  %v155 = vsub.f32 1.5, %v154
  %v156 = vmul.f32 %v151, %v155
  %vm157 = vweird.f32 %v140
  %vm158 = vweird.f32 %v151
  %vm159 = vmor %vm157, %vm158
  %v160 = vsel %vm159, %v151, %v156
  %v161 = vmul.f32 %v129, %v150
  %v162 = vmul.f32 %v130, %v160
  %v163 = vld [vmem:[%s3] sm:$0x1]
  %v165 = vperm.slane %v163, 0
  %v167 = vmul.f32 %v161, %v165
  %v168 = vmul.f32 %v162, %v165
  %v169 = vld [vmem:[%s4] sm:$0x1]
  %v171 = vperm.slane %v169, 0
  %v173 = vadd.f32 %v167, %v171
  %v174 = vadd.f32 %v168, %v171
  %175 = vst [vmem:[%s5] sm:$0xff] %v173
  %176 = vst [vmem:[%s5 + $0x8] sm:$0xff] %v174
  // Predicated region
  $region22: #{history_encoder_forward.1} parent=0 // pred_check
    _
  $region23: #{history_encoder_forward.1} parent=0 // pred_check_branch
    %178 = sbr.rel (0) target = $region25
  $region24: #{history_encoder_forward.1} parent=0 // pred_region
    _
  $region25: #{history_encoder_forward.1} parent=0 // pred_fallthru
    _
  // Predicated region
  $region26: #{history_encoder_forward.1} parent=0 // pred_check
    _
  $region27: #{history_encoder_forward.1} parent=0 // pred_check_branch
    %180 = sbr.rel (0) target = $region29
  $region28: #{history_encoder_forward.1} parent=0 // pred_region
    _
  $region29: #{history_encoder_forward.1} parent=0 // pred_fallthru
    _

</llo_original>
